<compile_context>
chip_gen: v5e
topology: v5e:2x2
jax: 0.10.0
libtpu: 0.0.40
codegen_flags: <defaults>
</compile_context>

<pallas_src>
import functools

import jax
import jax.numpy as jnp
from jax.experimental import pallas as pl
from jax.experimental.pallas import tpu as pltpu

DIM = 256        # small stand-in for the module's DIM = 1024
MLP_DEPTH = 6


# ----------------------------------------------------------------------------
# Kernel: grid = (batch_tiles, depth).  Layer axis is innermost ("arbitrary");
# the activation is carried across it in a VMEM scratch ref.
# ----------------------------------------------------------------------------
def mlp_kernel(x_ref, w_ref, b_ref, o_ref, h_ref, *, depth, is_sigma):
    l = pl.program_id(1)

    # Layer 0: seed the carried activation from the input tile (weight dtype,
    # i.e. bf16, which is what the MXU consumes anyway).
    @pl.when(l == 0)
    def _():
        h_ref[...] = x_ref[...].astype(h_ref.dtype)

    # Current layer: bf16 x bf16 on the MXU with f32 accumulation; bias add on
    # the VPU in f32.  w_ref block is (1, Din, Dout) -> squeeze the layer dim.
    acc = (jnp.dot(h_ref[...], w_ref[0], preferred_element_type=jnp.float32)
           + b_ref[pl.ds(l, 1), :])

    @pl.when(l < depth - 1)
    def _():
        # ReLU, stored back in the carried (bf16) activation.
        h_ref[...] = jnp.maximum(acc, 0.0).astype(h_ref.dtype)

    @pl.when(l == depth - 1)
    def _():
        out = acc
        if is_sigma:
            # nn.Softplus(beta=1, threshold=20)(x + 0.5) + 1e-6
            z = out + 0.5
            sp = jnp.where(z > 20.0, z,
                           jnp.log1p(jnp.exp(jnp.minimum(z, 20.0))))
            out = sp + 1e-6
        o_ref[...] = out.astype(o_ref.dtype)


# ----------------------------------------------------------------------------
# Builder (cached: constructed once per static configuration).
# ----------------------------------------------------------------------------
def _vmem_limit_bytes(Din, Dout, depth, tile_b, w_itemsize, b_itemsize):
    try:
        cap = int(pltpu.get_tpu_info().vmem_capacity_bytes)
    except Exception:  # pragma: no cover - conservative fallback (v7x per-TC)
        cap = 64 << 20
    needed = (2 * Din * Dout * w_itemsize          # double-buffered per-layer weights
              + depth * Dout * b_itemsize          # resident biases
              + 2 * tile_b * Din * 4               # double-buffered x tiles
              + 2 * tile_b * Dout * 4              # double-buffered out tiles
              + tile_b * Din * 4                   # carried activation scratch
              + (8 << 20))                         # compiler scratch / slack
    return int(min(max(needed, 32 << 20), int(cap * 0.75)))


@functools.lru_cache(maxsize=None)
def _build_call(B, Din, Dout, depth, tile_b, out_dtype, w_dtype, b_itemsize,
                is_sigma):
    kernel = functools.partial(mlp_kernel, depth=depth, is_sigma=is_sigma)
    w_itemsize = jnp.dtype(w_dtype).itemsize

    in_specs = [
        # x tile: resident across the layer axis (index_map constant in l).
        pl.BlockSpec((tile_b, Din), lambda i, l: (i, 0)),
        # per-layer weight block: streamed (double-buffered) along the l axis.
        pl.BlockSpec((1, Din, Dout), lambda i, l: (l, 0, 0)),
        # biases: tiny, fully resident.
        pl.BlockSpec((depth, Dout), lambda i, l: (0, 0)),
    ]
    out_specs = pl.BlockSpec((tile_b, Dout), lambda i, l: (i, 0))

    flops = 2 * B * depth * Din * Dout
    transcendentals = 2 * B * Dout if is_sigma else 0
    bytes_accessed = (B * Din * 4 + depth * Din * Dout * w_itemsize
                      + depth * Dout * b_itemsize + B * Dout * 4)

    return pl.pallas_call(
        kernel,
        out_shape=jax.ShapeDtypeStruct((B, Dout), out_dtype),
        grid_spec=pltpu.PrefetchScalarGridSpec(
            num_scalar_prefetch=0,
            grid=(B // tile_b, depth),           # layer (reduction-like) axis last
            in_specs=in_specs,
            out_specs=out_specs,
            scratch_shapes=[pltpu.VMEM((tile_b, Din), w_dtype)],  # carried h
        ),
        compiler_params=pltpu.CompilerParams(
            dimension_semantics=("parallel", "arbitrary"),
            vmem_limit_bytes=_vmem_limit_bytes(Din, Dout, depth, tile_b,
                                               w_itemsize, b_itemsize),
        ),
        cost_estimate=pl.CostEstimate(
            flops=flops,
            transcendentals=transcendentals,
            bytes_accessed=bytes_accessed,
        ),
    )


def _pick_tile_b(B):
    # Multiple of 8, <= 256, and (when B allows) >= 4 grid steps so each
    # TensorCore still has >= 2 steps to pipeline after v7x megacore sharding.
    if B <= 8:
        return 8
    t = min(256, (B // 4 // 8) * 8)
    return max(t, 8)


@functools.partial(jax.jit, static_argnames=("is_sigma", "tile_b"))
def mlp_pallas(x, ws, bs, *, is_sigma=False, tile_b=None):
    B, Din = x.shape
    depth, Din_w, Dout = ws.shape
    assert Din_w == Din and Dout == Din, "square MLP (input=hidden=output) expected"
    assert bs.shape == (depth, Dout)

    tb = tile_b if tile_b is not None else _pick_tile_b(B)
    B_pad = pl.cdiv(B, tb) * tb
    xp = x if B_pad == B else jnp.pad(x, ((0, B_pad - B), (0, 0)))

    call = _build_call(B_pad, Din, Dout, depth, tb, x.dtype, ws.dtype,
                       bs.dtype.itemsize, bool(is_sigma))
    out = call(xp, ws, bs)
    return out if B_pad == B else out[:B]


# ----------------------------------------------------------------------------
# Pure-JAX reference with identical casting (bf16 matmul, f32 accumulate).
# NOTE: bf16 MXU inputs match the kernel but drift slightly vs a pure-f32
# PyTorch nn.Linear stack; use f32 weights if strict f32 parity is required.
# ----------------------------------------------------------------------------
def mlp_reference(x, ws, bs, *, is_sigma=False):
    depth = ws.shape[0]
    h = x.astype(jnp.float32)
    for l in range(depth):
        h = jnp.dot(h.astype(ws.dtype), ws[l],
                    preferred_element_type=jnp.float32) + bs[l][None, :]
        if l < depth - 1:
            h = jnp.maximum(h, 0.0)
    if is_sigma:
        z = h + 0.5
        sp = jnp.where(z > 20.0, z, jnp.log1p(jnp.exp(jnp.minimum(z, 20.0))))
        h = sp + 1e-6
    return h.astype(x.dtype)


def init_params(key, depth, din, dhid, dout):
    """Deterministic parameter init (Kaiming-ish uniform like nn.Linear)."""
    dims = [din] + [dhid] * (depth - 1) + [dout]
    ws, bs = [], []
    for l in range(depth):
        key, kw, kb = jax.random.split(key, 3)
        bound = 1.0 / (dims[l] ** 0.5)
        ws.append(jax.random.uniform(kw, (dims[l], dims[l + 1]),
                                     jnp.float32, -bound, bound))
        bs.append(jax.random.uniform(kb, (dims[l + 1],),
                                     jnp.float32, -bound, bound))
    return jnp.stack(ws), jnp.stack(bs)   # [depth, D, D], [depth, D]


if __name__ == "__main__":
    key = jax.random.PRNGKey(0)
    k_x, k_p = jax.random.split(key)

    B = 512
    x = jax.random.normal(k_x, (B, DIM), jnp.float32)
    ws_f32, bs = init_params(k_p, MLP_DEPTH, DIM, DIM, DIM)
    ws = ws_f32.astype(jnp.bfloat16)   # bf16 weights: MXU-native, half the DMA/VMEM
    # TODO(synk): optional int8 weight quantization path for v5e/v6e (no int MXU on v7x).

    # Default head (is_Sigma=False)
    out = jax.block_until_ready(mlp_pallas(x, ws, bs, is_sigma=False))
    ref = mlp_reference(x, ws, bs, is_sigma=False)
    assert jnp.allclose(out, ref, atol=2e-2, rtol=2e-2), "mismatch (is_Sigma=False)"

    # Sigma head: Softplus(x + 0.5) + 1e-6
    out_s = jax.block_until_ready(mlp_pallas(x, ws, bs, is_sigma=True))
    ref_s = mlp_reference(x, ws, bs, is_sigma=True)
    assert jnp.allclose(out_s, ref_s, atol=2e-2, rtol=2e-2), "mismatch (is_Sigma=True)"

    print("KERNEL_OK")
</pallas_src>

<mosaic_0001>
module attributes {stable_mosaic.version = 11 : i64} {
  func.func @mlp_kernel(%arg0: i32, %arg1: i32, %arg2: memref<128x256xf32, #tpu.memory_space<vmem>>, %arg3: memref<1x256x256xbf16, #tpu.memory_space<vmem>>, %arg4: memref<6x256xf32, #tpu.memory_space<vmem>>, %arg5: memref<128x256xf32, #tpu.memory_space<vmem>>, %arg6: memref<128x256xbf16, #tpu.memory_space<vmem>>) attributes {dimension_semantics = [#tpu.dimension_semantics<parallel>, #tpu.dimension_semantics<arbitrary>], iteration_bounds = array<i64: 4, 6>, scalar_prefetch = 0 : i64, scratch_operands = 1 : i64, tpu.core_type = #tpu.core_type<tc>, window_params = [{transform_indices = @transform_0, window_bounds = array<i64: 128, 256>}, {transform_indices = @transform_1, window_bounds = array<i64: 1, 256, 256>}, {pipeline_mode = #tpu.pipeline_mode<synchronous>, transform_indices = @transform_2, window_bounds = array<i64: 6, 256>}, {transform_indices = @transform_3, window_bounds = array<i64: 128, 256>}]} {
    %c0_i32 = arith.constant 0 : i32
    %0 = arith.cmpi eq, %arg1, %c0_i32 : i32
    %1 = arith.extui %0 : i1 to i32
    %c0_i32_0 = arith.constant 0 : i32
    %2 = arith.cmpi ne, %1, %c0_i32_0 : i32
    scf.if %2 {
      %c0_9 = arith.constant 0 : index
      %c0_10 = arith.constant 0 : index
      %17 = vector.load %arg2[%c0_9, %c0_10] : memref<128x256xf32, #tpu.memory_space<vmem>>, vector<128x256xf32>
      %18 = arith.truncf %17 : vector<128x256xf32> to vector<128x256xbf16>
      %c0_11 = arith.constant 0 : index
      %c0_12 = arith.constant 0 : index
      %19 = vector.load %arg6[%c0_11, %c0_12] : memref<128x256xbf16, #tpu.memory_space<vmem>>, vector<128x256xbf16>
      tpu.vector_store %arg6[%c0_11, %c0_12], %18 {strides = array<i32>} : memref<128x256xbf16, #tpu.memory_space<vmem>>, vector<128x256xbf16>,
    } else {
    }
    %c0 = arith.constant 0 : index
    %c0_1 = arith.constant 0 : index
    %3 = vector.load %arg6[%c0, %c0_1] : memref<128x256xbf16, #tpu.memory_space<vmem>>, vector<128x256xbf16>
    %c0_2 = arith.constant 0 : index
    %c0_3 = arith.constant 0 : index
    %c0_4 = arith.constant 0 : index
    %4 = vector.load %arg3[%c0_2, %c0_3, %c0_4] : memref<1x256x256xbf16, #tpu.memory_space<vmem>>, vector<1x256x256xbf16>
    %5 = vector.shape_cast %4 : vector<1x256x256xbf16> to vector<256x256xbf16>
    %cst = arith.constant dense<0.000000e+00> : vector<128x256xf32>
    %6 = tpu.matmul %3, %5, %cst {dimension_numbers = #tpu.dot_dimension_numbers<[1], [0], [0], [1], [0, 0, 1, 1], [], []>} : vector<128x256xbf16>, vector<256x256xbf16>, vector<128x256xf32> -> vector<128x256xf32>
    %7 = arith.index_cast %arg1 : i32 to index
    %c0_5 = arith.constant 0 : index
    %8 = vector.load %arg4[%7, %c0_5] : memref<6x256xf32, #tpu.memory_space<vmem>>, vector<1x256xf32>
    %9 = vector.broadcast %8 : vector<1x256xf32> to vector<128x256xf32>
    %10 = arith.addf %6, %9 : vector<128x256xf32>
    %c5_i32 = arith.constant 5 : i32
    %11 = arith.cmpi slt, %arg1, %c5_i32 : i32
    %12 = arith.extui %11 : i1 to i32
    %c0_i32_6 = arith.constant 0 : i32
    %13 = arith.cmpi ne, %12, %c0_i32_6 : i32
    scf.if %13 {
      %cst_9 = arith.constant 0.000000e+00 : f32
      %17 = vector.broadcast %cst_9 : f32 to vector<128x256xf32>
      %18 = arith.maximumf %10, %17 : vector<128x256xf32>
      %19 = arith.truncf %18 : vector<128x256xf32> to vector<128x256xbf16>
      %c0_10 = arith.constant 0 : index
      %c0_11 = arith.constant 0 : index
      %20 = vector.load %arg6[%c0_10, %c0_11] : memref<128x256xbf16, #tpu.memory_space<vmem>>, vector<128x256xbf16>
      tpu.vector_store %arg6[%c0_10, %c0_11], %19 {strides = array<i32>} : memref<128x256xbf16, #tpu.memory_space<vmem>>, vector<128x256xbf16>,
    } else {
    }
    %c5_i32_7 = arith.constant 5 : i32
    %14 = arith.cmpi eq, %arg1, %c5_i32_7 : i32
    %15 = arith.extui %14 : i1 to i32
    %c0_i32_8 = arith.constant 0 : i32
    %16 = arith.cmpi ne, %15, %c0_i32_8 : i32
    scf.if %16 {
      %c0_9 = arith.constant 0 : index
      %c0_10 = arith.constant 0 : index
      %17 = vector.load %arg5[%c0_9, %c0_10] : memref<128x256xf32, #tpu.memory_space<vmem>>, vector<128x256xf32>
      tpu.vector_store %arg5[%c0_9, %c0_10], %10 {strides = array<i32>} : memref<128x256xf32, #tpu.memory_space<vmem>>, vector<128x256xf32>,
    } else {
    }
    return
  }
  func.func @transform_0(%arg0: i32, %arg1: i32) -> (i32, i32) {
    %c0_i32 = arith.constant 0 : i32
    %c0_i32_0 = arith.constant 0 : i32
    return %arg0, %c0_i32 : i32, i32
  }
  func.func @transform_1(%arg0: i32, %arg1: i32) -> (i32, i32, i32) {
    %c0_i32 = arith.constant 0 : i32
    %c0_i32_0 = arith.constant 0 : i32
    %c0_i32_1 = arith.constant 0 : i32
    return %arg1, %c0_i32, %c0_i32_0 : i32, i32, i32
  }
  func.func @transform_2(%arg0: i32, %arg1: i32) -> (i32, i32) {
    %c0_i32 = arith.constant 0 : i32
    %c0_i32_0 = arith.constant 0 : i32
    %c0_i32_1 = arith.constant 0 : i32
    return %c0_i32, %c0_i32_0 : i32, i32
  }
  func.func @transform_3(%arg0: i32, %arg1: i32) -> (i32, i32) {
    %c0_i32 = arith.constant 0 : i32
    %c0_i32_0 = arith.constant 0 : i32
    return %arg0, %c0_i32 : i32, i32
  }
}

</mosaic_0001>

<llo_original>
// kernel: mlp_pallas.1
$region0: #{mlp_pallas.1}
  #allocation0 [shape = 'u32[]', space=smem, size = 0x4, offset = 0x4, fixed_abs, tag = 'smem constant byte address 0x4 - core index']
  #allocation1 [shape = 'u32[72,128]{1,0:T(1,128)}', space=vmem, size = 0x9000, scoped, tag = 'internal scratch']
  #allocation2 [shape = 'bf16[128,256]{1,0:T(8,128)(2,1)}', space=vmem, size = 0x10000, scoped, tag = 'scratch operand']
  %s0 = inlined_call_operand.hbm [shape: f32[512,256], index: 0, kind: input, shape index: {}]
  %s1 = inlined_call_operand.hbm [shape: bf16[6,256,256], index: 1, kind: input, shape index: {}]
  %s2 = inlined_call_operand.hbm [shape: f32[6,256], index: 2, kind: input, shape index: {}]
  %s3 = inlined_call_operand.hbm [shape: f32[512,256], index: 3, kind: output, shape index: {}]
  %s4 = sld [smem:[#allocation0]]
  $region69: #{mlp_pallas.1} parent=0
    _
  %s6 = ssub.s32 1, %s4
  %s7 = scalar_select 0, %s6, %s4
  $region1: #{mlp_pallas.1} parent=0
    #allocation3 [shape = 'u8[262144]{0}', space=vmem, size = 0x40000, scoped, tag = 'input window, operand 0']
    #allocation4 [shape = 's32[2]{0}', space=sflag, size = 0x8, scoped, tag = 'scoped memory for mlp_pallas.1']
    #allocation5 [shape = 's32[2]{0}', space=sflag, size = 0x8, scoped, tag = 'scoped memory for mlp_pallas.1']
    #allocation6 [shape = 'u8[262144]{0}', space=vmem, size = 0x40000, scoped, tag = 'input window, operand 1']
    #allocation7 [shape = 's32[2]{0}', space=sflag, size = 0x8, scoped, tag = 'scoped memory for mlp_pallas.1']
    #allocation8 [shape = 'u8[8192]{0}', space=vmem, size = 0x2000, scoped, tag = 'input window, operand 2, single buffered']
    #allocation9 [shape = 'u8[262144]{0}', space=vmem, size = 0x40000, scoped, tag = 'output window, operand 0']
    %8 = vsyncpa [#allocation4], 0
    %s9 = scalar_lea.sflag [#allocation4], 1
    %10 = vsyncpa %s9, 0
    %11 = vsyncpa [#allocation7], 0
    %s12 = scalar_lea.sflag [#allocation7], 1
    %13 = vsyncpa %s12, 0
    %14 = vsyncpa [#allocation5], 0
    %s15 = scalar_lea.sflag [#allocation5], 1
    %16 = vsyncpa %s15, 0
    loop: start=0, step=1, limit=26
    $region2: #{mlp_pallas.1} parent=1 // loop_pre_header
      _
    $region3: #{mlp_pallas.1} parent=1 // loop_header
      %s18 = sphi 0, %s22
      %p19 = scmp.ge.s32.totalorder %s18, 26
      %s25 = sphi 0, %s37
      %s26 = sphi 0, %s33
      %s27 = sphi 0, %s25
      %s28 = sphi 0, %s26
      %s29 = sphi 0, %s27
      %s30 = sphi 0, %s28
      %s40 = sphi 0, %s42
      %s43 = sphi 0, %s40
      %s44 = sphi 0, %s43
      %s60 = sphi 0, %s44
      %s66 = sphi 0, %s68
      %s69 = sphi 0, %s66
      %s70 = sphi 0, %s69
      %s86 = sphi 0, %s70
      %s90 = sphi 0, %s90
      %s92 = sphi 0, %s90
      %s93 = sphi 0, %s92
      %s107 = sphi 0, %s93
      %s113 = sphi 0, %s115
      %s116 = sphi 0, %s113
      %s117 = sphi 0, %s116
      %s133 = sphi 0, %s117
    $region4: #{mlp_pallas.1} parent=1 // loop_header_branch
      %21 = sbr.rel (%p19) target = $region8
    $region5: #{mlp_pallas.1} parent=1 // loop_body
      %s23 = ssub.s32 %s18, 1
      %s24 = ssub.s32 %s18, 2
      %s31 = sadd.s32 1, %s26
      %p32 = scmp.ge.s32.totalorder %s31, 6
      %s33 = scalar_select %p32, 0, %s31
      %s34 = sadd.s32 1, %s25
      %s35 = scalar_select %p32, %s34, %s25
      %p36 = scmp.ge.s32.totalorder %s35, 4
      %s37 = scalar_select %p36, 0, %s35
      %s38 = ssub.s32 %s25, %s37
      %p39 = scmp.eq.s32.totalorder %s38, 0
      %s41 = sadd.s32 %s40, 1
      %s42 = scalar_select %p39, %s40, %s41
      %p45 = pneg %p39
      %p46 = scmp.eq.s32.totalorder %s18, 23
      %p47 = por %p45, %p46
      %p48 = scmp.ne.s32.totalorder %s40, %s43
      %p49 = scmp.eq.s32.totalorder %s18, 0
      %p50 = por %p48, %p49
      %p51 = scmp.ne.s32.totalorder %s40, %s43
      %p52 = scmp.eq.s32.totalorder %s23, 23
      %p53 = por %p51, %p52
      %p54 = scmp.ne.s32.totalorder %s43, %s44
      %p55 = scmp.eq.s32.totalorder %s23, 0
      %p56 = por %p54, %p55
      %p57 = scmp.ne.s32.totalorder %s43, %s44
      %p58 = scmp.eq.s32.totalorder %s24, 23
      %p59 = por %p57, %p58
      %p61 = scmp.ne.s32.totalorder %s44, %s60
      %p62 = scmp.eq.s32.totalorder %s24, 0
      %p63 = por %p61, %p62
      %s64 = ssub.s32 %s26, %s33
      %p65 = scmp.eq.s32.totalorder %s64, 0
      %s67 = sadd.s32 %s66, 1
      %s68 = scalar_select %p65, %s66, %s67
      %p71 = pneg %p65
      %p72 = scmp.eq.s32.totalorder %s18, 23
      %p73 = por %p71, %p72
      %p74 = scmp.ne.s32.totalorder %s66, %s69
      %p75 = scmp.eq.s32.totalorder %s18, 0
      %p76 = por %p74, %p75
      %p77 = scmp.ne.s32.totalorder %s66, %s69
      %p78 = scmp.eq.s32.totalorder %s23, 23
      %p79 = por %p77, %p78
      %p80 = scmp.ne.s32.totalorder %s69, %s70
      %p81 = scmp.eq.s32.totalorder %s23, 0
      %p82 = por %p80, %p81
      %p83 = scmp.ne.s32.totalorder %s69, %s70
      %p84 = scmp.eq.s32.totalorder %s24, 23
      %p85 = por %p83, %p84
      %p87 = scmp.ne.s32.totalorder %s70, %s86
      %p88 = scmp.eq.s32.totalorder %s24, 0
      %p89 = por %p87, %p88
      %s91 = sadd.s32 %s90, 1
      %p94 = scmp.eq.s32.totalorder %s18, 23
      %p95 = scmp.ne.s32.totalorder %s90, %s92
      %p96 = scmp.eq.s32.totalorder %s18, 0
      %p97 = por %p95, %p96
      %p98 = scmp.ne.s32.totalorder %s90, %s92
      %p99 = scmp.eq.s32.totalorder %s23, 23
      %p100 = por %p98, %p99
      %p101 = scmp.ne.s32.totalorder %s92, %s93
      %p102 = scmp.eq.s32.totalorder %s23, 0
      %p103 = por %p101, %p102
      %p104 = scmp.ne.s32.totalorder %s92, %s93
      %p105 = scmp.eq.s32.totalorder %s24, 23
      %p106 = por %p104, %p105
      %p108 = scmp.ne.s32.totalorder %s93, %s107
      %p109 = scmp.eq.s32.totalorder %s24, 0
      %p110 = por %p108, %p109
      %s111 = ssub.s32 %s25, %s37
      %p112 = scmp.eq.s32.totalorder %s111, 0
      %s114 = sadd.s32 %s113, 1
      %s115 = scalar_select %p112, %s113, %s114
      %p118 = pneg %p112
      %p119 = scmp.eq.s32.totalorder %s18, 23
      %p120 = por %p118, %p119
      %p121 = scmp.ne.s32.totalorder %s113, %s116
      %p122 = scmp.eq.s32.totalorder %s18, 0
      %p123 = por %p121, %p122
      %p124 = scmp.ne.s32.totalorder %s113, %s116
      %p125 = scmp.eq.s32.totalorder %s23, 23
      %p126 = por %p124, %p125
      %p127 = scmp.ne.s32.totalorder %s116, %s117
      %p128 = scmp.eq.s32.totalorder %s23, 0
      %p129 = por %p127, %p128
      %p130 = scmp.ne.s32.totalorder %s116, %s117
      %p131 = scmp.eq.s32.totalorder %s24, 23
      %p132 = por %p130, %p131
      %p134 = scmp.ne.s32.totalorder %s117, %s133
      %p135 = scmp.eq.s32.totalorder %s24, 0
      %p136 = por %p134, %p135
      %p137 = scmp.le.s32.totalorder 1, %s18
      %p138 = scmp.lt.s32.totalorder %s18, 25
      %p139 = pnand %p137, %p138
      %p140 = pneg %p139
      // Predicated region
      $region9: #{mlp_pallas.1} parent=5 // pred_check
        _
      $region10: #{mlp_pallas.1} parent=5 // pred_check_branch
        %142 = sbr.rel (%p139) target = $region12
      $region11: #{mlp_pallas.1} parent=5 // pred_region
        %s143 = ssub.s32 %s18, 1
        // Predicated region
        $region13: #{mlp_pallas.1} parent=11 // pred_check
          %p144 = pneg %p103
        $region14: #{mlp_pallas.1} parent=11 // pred_check_branch
          %146 = sbr.rel (%p144) target = $region16
        $region15: #{mlp_pallas.1} parent=11 // pred_region
          %148 = vsyncadd [#allocation7], 0
          %s150 = sshll.u32 %s2, 4
          %s151 = int_to_ptr.hbm [resolvable:$true] %s150
          %s152 = sshll.u32 [#allocation8], 4
          %s153 = int_to_ptr.vmem [resolvable:$true] %s152
          %155 = dma.hbm_to_vmem [thread:$0]  %s151, 256, %s153, [#allocation7]
        $region16: #{mlp_pallas.1} parent=11 // pred_fallthru
          _
      $region12: #{mlp_pallas.1} parent=5 // pred_fallthru
        _
      %p156 = scmp.lt.s32.totalorder %s18, 24
      // Predicated region
      $region17: #{mlp_pallas.1} parent=5 // pred_check
        %p157 = pneg %p156
      $region18: #{mlp_pallas.1} parent=5 // pred_check_branch
        %159 = sbr.rel (%p157) target = $region20
      $region19: #{mlp_pallas.1} parent=5 // pred_region
        // Predicated region
        $region21: #{mlp_pallas.1} parent=19 // pred_check
          %p160 = pneg %p50
        $region22: #{mlp_pallas.1} parent=19 // pred_check_branch
          %162 = sbr.rel (%p160) target = $region24
        $region23: #{mlp_pallas.1} parent=19 // pred_region
          %s163 = sand.u32 %s40, 1
          %s164 = scalar_lea.sflag [#allocation4], %s163
          %s165 = sand.u32 %s40, 1
          %s166 = smul.addr %s165, 256
          %s167 = scalar_lea.vmem [#allocation3], %s166
          %s168 = smul.u32 16, %s25
          %170 = vsyncadd %s164, 0
          %s171 = smul.addr %s168, 2
          %s172 = smul.addr %s171, 8
          %s173 = scalar_lea.hbm %s0, %s172
          %s174 = sshll.u32 %s173, 4
          %s175 = int_to_ptr.hbm [resolvable:$true] %s174
          %s176 = sshll.u32 %s167, 4
          %s177 = int_to_ptr.vmem [resolvable:$true] %s176
          %182 = dma.hbm_to_vmem [thread:$0]  %s175, 4096, %s177, %s164, 256, 256, 16
        $region24: #{mlp_pallas.1} parent=19 // pred_fallthru
          _
        // Predicated region
        $region25: #{mlp_pallas.1} parent=19 // pred_check
          %p183 = pneg %p76
        $region26: #{mlp_pallas.1} parent=19 // pred_check_branch
          %185 = sbr.rel (%p183) target = $region28
        $region27: #{mlp_pallas.1} parent=19 // pred_region
          %s186 = sand.u32 %s18, 1
          %s187 = scalar_lea.sflag [#allocation7], %s186
          %s188 = sand.u32 %s66, 1
          %s189 = smul.addr %s188, 256
          %s190 = scalar_lea.vmem [#allocation6], %s189
          %192 = vsyncadd %s187, 0
          %s193 = smul.addr %s26, 64
          %s194 = smul.addr %s193, 4
          %s195 = scalar_lea.hbm %s1, %s194
          %s196 = sshll.u32 %s195, 4
          %s197 = int_to_ptr.hbm [resolvable:$true] %s196
          %s198 = sshll.u32 %s190, 4
          %s199 = int_to_ptr.vmem [resolvable:$true] %s198
          %204 = dma.hbm_to_vmem [thread:$0]  %s197, 4096, %s199, %s187, 128, 128, 8
        $region28: #{mlp_pallas.1} parent=19 // pred_fallthru
          _
      $region20: #{mlp_pallas.1} parent=5 // pred_fallthru
        _
      %p205 = scmp.le.s32.totalorder 1, %s18
      %p206 = scmp.lt.s32.totalorder %s18, 25
      %p207 = pnand %p205, %p206
      %p208 = pneg %p207
      // Predicated region
      $region29: #{mlp_pallas.1} parent=5 // pred_check
        _
      $region30: #{mlp_pallas.1} parent=5 // pred_check_branch
        %210 = sbr.rel (%p207) target = $region32
      $region31: #{mlp_pallas.1} parent=5 // pred_region
        %s211 = ssub.s32 %s18, 1
        %s212 = sand.u32 %s43, 1
        %s213 = scalar_lea.sflag [#allocation4], %s212
        %s214 = sand.u32 %s43, 1
        %s215 = smul.addr %s214, 256
        %s216 = scalar_lea.vmem [#allocation3], %s215
        // Predicated region
        $region33: #{mlp_pallas.1} parent=31 // pred_check
          %p217 = pneg %p56
        $region34: #{mlp_pallas.1} parent=31 // pred_check_branch
          %219 = sbr.rel (%p217) target = $region36
        $region35: #{mlp_pallas.1} parent=31 // pred_region
          %221 = dma.done %s213, 4096
        $region36: #{mlp_pallas.1} parent=31 // pred_fallthru
          _
        %s222 = sand.u32 %s23, 1
        %s223 = scalar_lea.sflag [#allocation7], %s222
        %s224 = sand.u32 %s69, 1
        %s225 = smul.addr %s224, 256
        %s226 = scalar_lea.vmem [#allocation6], %s225
        // Predicated region
        $region37: #{mlp_pallas.1} parent=31 // pred_check
          %p227 = pneg %p82
        $region38: #{mlp_pallas.1} parent=31 // pred_check_branch
          %229 = sbr.rel (%p227) target = $region40
        $region39: #{mlp_pallas.1} parent=31 // pred_region
          %231 = dma.done %s223, 4096
        $region40: #{mlp_pallas.1} parent=31 // pred_fallthru
          _
        // Predicated region
        $region41: #{mlp_pallas.1} parent=31 // pred_check
          %p232 = pneg %p103
        $region42: #{mlp_pallas.1} parent=31 // pred_check_branch
          %234 = sbr.rel (%p232) target = $region44
        $region43: #{mlp_pallas.1} parent=31 // pred_region
          %236 = dma.done [#allocation7], 256
        $region44: #{mlp_pallas.1} parent=31 // pred_fallthru
          _
        %s237 = sand.u32 %s43, 1
        %s238 = scalar_lea.sflag [#allocation4], %s237
        %s239 = sand.u32 %s43, 1
        %s240 = smul.addr %s239, 256
        %s241 = scalar_lea.vmem [#allocation3], %s240
        %p242 = pneg %p56
        %p243 = pneg %p53
        %s244 = sand.u32 %s23, 1
        %s245 = scalar_lea.sflag [#allocation7], %s244
        %s246 = sand.u32 %s69, 1
        %s247 = smul.addr %s246, 256
        %s248 = scalar_lea.vmem [#allocation6], %s247
        %p249 = pneg %p82
        %p250 = pneg %p79
        %p251 = pneg %p103
        %p252 = pneg %p100
        %p253 = pneg %p129
        %p254 = pneg %p126
        %s255 = sand.u32 %s116, 1
        %s256 = scalar_lea.sflag [#allocation5], %s255
        %s257 = sand.u32 %s116, 1
        %s258 = smul.addr %s257, 256
        %s259 = scalar_lea.vmem [#allocation9], %s258
        %s260 = smul.u32 16, %s27
        %s261 = smul.u32 16, %s27
        %p262 = scmp.eq.s32.totalorder %s28, 0
        // Predicated region
        $region45: #{mlp_pallas.1} parent=31 // pred_check
          %p263 = pneg %p262
        $region46: #{mlp_pallas.1} parent=31 // pred_check_branch
          %265 = sbr.rel (%p263) target = $region48
        $region47: #{mlp_pallas.1} parent=31 // pred_region
          %v266 = vld [vmem:[%s216] sm:$0xff]
          %v267 = vld [vmem:[%s216 + $0x8] sm:$0xff]
          %v268 = vld [vmem:[%s216 + $0x10] sm:$0xff]
          %v269 = vld [vmem:[%s216 + $0x18] sm:$0xff]
          %v270 = vld [vmem:[%s216 + $0x20] sm:$0xff]
          %v271 = vld [vmem:[%s216 + $0x28] sm:$0xff]
          %v272 = vld [vmem:[%s216 + $0x30] sm:$0xff]
          %v273 = vld [vmem:[%s216 + $0x38] sm:$0xff]
          %v274 = vld [vmem:[%s216 + $0x40] sm:$0xff]
          %v275 = vld [vmem:[%s216 + $0x48] sm:$0xff]
          %v276 = vld [vmem:[%s216 + $0x50] sm:$0xff]
          %v277 = vld [vmem:[%s216 + $0x58] sm:$0xff]
          %v278 = vld [vmem:[%s216 + $0x60] sm:$0xff]
          %v279 = vld [vmem:[%s216 + $0x68] sm:$0xff]
          %v280 = vld [vmem:[%s216 + $0x70] sm:$0xff]
          %v281 = vld [vmem:[%s216 + $0x78] sm:$0xff]
          %v282 = vld [vmem:[%s216 + $0x80] sm:$0xff]
          %v283 = vld [vmem:[%s216 + $0x88] sm:$0xff]
          %v284 = vld [vmem:[%s216 + $0x90] sm:$0xff]
          %v285 = vld [vmem:[%s216 + $0x98] sm:$0xff]
          %v286 = vld [vmem:[%s216 + $0xa0] sm:$0xff]
          %v287 = vld [vmem:[%s216 + $0xa8] sm:$0xff]
          %v288 = vld [vmem:[%s216 + $0xb0] sm:$0xff]
          %v289 = vld [vmem:[%s216 + $0xb8] sm:$0xff]
          %v290 = vld [vmem:[%s216 + $0xc0] sm:$0xff]
          %v291 = vld [vmem:[%s216 + $0xc8] sm:$0xff]
          %v292 = vld [vmem:[%s216 + $0xd0] sm:$0xff]
          %v293 = vld [vmem:[%s216 + $0xd8] sm:$0xff]
          %v294 = vld [vmem:[%s216 + $0xe0] sm:$0xff]
          %v295 = vld [vmem:[%s216 + $0xe8] sm:$0xff]
          %v296 = vld [vmem:[%s216 + $0xf0] sm:$0xff]
          %v297 = vld [vmem:[%s216 + $0xf8] sm:$0xff]
          %v298 = vpack.c.bf16 %v267, %v266
          %v299 = vpack.c.bf16 %v269, %v268
          %v300 = vpack.c.bf16 %v271, %v270
          %v301 = vpack.c.bf16 %v273, %v272
          %v302 = vpack.c.bf16 %v275, %v274
          %v303 = vpack.c.bf16 %v277, %v276
          %v304 = vpack.c.bf16 %v279, %v278
          %v305 = vpack.c.bf16 %v281, %v280
          %v306 = vpack.c.bf16 %v283, %v282
          %v307 = vpack.c.bf16 %v285, %v284
          %v308 = vpack.c.bf16 %v287, %v286
          %v309 = vpack.c.bf16 %v289, %v288
          %v310 = vpack.c.bf16 %v291, %v290
          %v311 = vpack.c.bf16 %v293, %v292
          %v312 = vpack.c.bf16 %v295, %v294
          %v313 = vpack.c.bf16 %v297, %v296
          %314 = vst [vmem:[#allocation2] sm:$0xff] %v298
          %315 = vst [vmem:[#allocation2 + $0x8] sm:$0xff] %v299
          %316 = vst [vmem:[#allocation2 + $0x10] sm:$0xff] %v300
          %317 = vst [vmem:[#allocation2 + $0x18] sm:$0xff] %v301
          %318 = vst [vmem:[#allocation2 + $0x20] sm:$0xff] %v302
          %319 = vst [vmem:[#allocation2 + $0x28] sm:$0xff] %v303
          %320 = vst [vmem:[#allocation2 + $0x30] sm:$0xff] %v304
          %321 = vst [vmem:[#allocation2 + $0x38] sm:$0xff] %v305
          %322 = vst [vmem:[#allocation2 + $0x40] sm:$0xff] %v306
          %323 = vst [vmem:[#allocation2 + $0x48] sm:$0xff] %v307
          %324 = vst [vmem:[#allocation2 + $0x50] sm:$0xff] %v308
          %325 = vst [vmem:[#allocation2 + $0x58] sm:$0xff] %v309
          %326 = vst [vmem:[#allocation2 + $0x60] sm:$0xff] %v310
          %327 = vst [vmem:[#allocation2 + $0x68] sm:$0xff] %v311
          %328 = vst [vmem:[#allocation2 + $0x70] sm:$0xff] %v312
          %329 = vst [vmem:[#allocation2 + $0x78] sm:$0xff] %v313
        $region48: #{mlp_pallas.1} parent=31 // pred_fallthru
          _
        %v330 = vld [vmem:[#allocation2] sm:$0xff]
        %v331 = vld [vmem:[#allocation2 + $0x8] sm:$0xff]
        %v332 = vld [vmem:[#allocation2 + $0x10] sm:$0xff]
        %v333 = vld [vmem:[#allocation2 + $0x18] sm:$0xff]
        %v334 = vld [vmem:[#allocation2 + $0x20] sm:$0xff]
        %v335 = vld [vmem:[#allocation2 + $0x28] sm:$0xff]
        %v336 = vld [vmem:[#allocation2 + $0x30] sm:$0xff]
        %v337 = vld [vmem:[#allocation2 + $0x38] sm:$0xff]
        %v338 = vld [vmem:[#allocation2 + $0x40] sm:$0xff]
        %v339 = vld [vmem:[#allocation2 + $0x48] sm:$0xff]
        %v340 = vld [vmem:[#allocation2 + $0x50] sm:$0xff]
        %v341 = vld [vmem:[#allocation2 + $0x58] sm:$0xff]
        %v342 = vld [vmem:[#allocation2 + $0x60] sm:$0xff]
        %v343 = vld [vmem:[#allocation2 + $0x68] sm:$0xff]
        %v344 = vld [vmem:[#allocation2 + $0x70] sm:$0xff]
        %v345 = vld [vmem:[#allocation2 + $0x78] sm:$0xff]
        %v346 = vld [vmem:[%s226] sm:$0xff]
        %v347 = vld [vmem:[%s226 + $0x8] sm:$0xff]
        %v348 = vld [vmem:[%s226 + $0x10] sm:$0xff]
        %v349 = vld [vmem:[%s226 + $0x18] sm:$0xff]
        %v350 = vld [vmem:[%s226 + $0x20] sm:$0xff]
        %v351 = vld [vmem:[%s226 + $0x28] sm:$0xff]
        %v352 = vld [vmem:[%s226 + $0x30] sm:$0xff]
        %v353 = vld [vmem:[%s226 + $0x38] sm:$0xff]
        %v354 = vld [vmem:[%s226 + $0x40] sm:$0xff]
        %v355 = vld [vmem:[%s226 + $0x48] sm:$0xff]
        %v356 = vld [vmem:[%s226 + $0x50] sm:$0xff]
        %v357 = vld [vmem:[%s226 + $0x58] sm:$0xff]
        %v358 = vld [vmem:[%s226 + $0x60] sm:$0xff]
        %v359 = vld [vmem:[%s226 + $0x68] sm:$0xff]
        %v360 = vld [vmem:[%s226 + $0x70] sm:$0xff]
        %v361 = vld [vmem:[%s226 + $0x78] sm:$0xff]
        %v362 = vld [vmem:[%s226 + $0x80] sm:$0xff]
        %v363 = vld [vmem:[%s226 + $0x88] sm:$0xff]
        %v364 = vld [vmem:[%s226 + $0x90] sm:$0xff]
        %v365 = vld [vmem:[%s226 + $0x98] sm:$0xff]
        %v366 = vld [vmem:[%s226 + $0xa0] sm:$0xff]
        %v367 = vld [vmem:[%s226 + $0xa8] sm:$0xff]
        %v368 = vld [vmem:[%s226 + $0xb0] sm:$0xff]
        %v369 = vld [vmem:[%s226 + $0xb8] sm:$0xff]
        %v370 = vld [vmem:[%s226 + $0xc0] sm:$0xff]
        %v371 = vld [vmem:[%s226 + $0xc8] sm:$0xff]
        %v372 = vld [vmem:[%s226 + $0xd0] sm:$0xff]
        %v373 = vld [vmem:[%s226 + $0xd8] sm:$0xff]
        %v374 = vld [vmem:[%s226 + $0xe0] sm:$0xff]
        %v375 = vld [vmem:[%s226 + $0xe8] sm:$0xff]
        %v376 = vld [vmem:[%s226 + $0xf0] sm:$0xff]
        %v377 = vld [vmem:[%s226 + $0xf8] sm:$0xff]
        %s378 = sshra.s32 %s28, 3
        %s379 = sand.u32 %s28, 7
        %s380 = sshra.s32 %s28, 3
        %s381 = sand.u32 %s28, 7
        %s382 = smul.u32 %s378, 2
        %s383 = smul.u32 %s382, 8
        %s384 = sadd.s32 %s383, %s381
        %s385 = scalar_lea.vmem [#allocation8], %s384
        %v386 = vld [vmem:[%s385] ss:$8 sm:$0x3]
        %v388 = vperm.slane %v386, 0
        %v389 = vperm.slane %v386, 1
        %v408 = vunpack.c.l.b16 %v330
        %v409 = vunpack.c.h.b16 %v330
        %v410 = vunpack.c.l.b16 %v331
        %v411 = vunpack.c.h.b16 %v331
        %v412 = vunpack.c.l.b16 %v332
        %v413 = vunpack.c.h.b16 %v332
        %v414 = vunpack.c.l.b16 %v333
        %v415 = vunpack.c.h.b16 %v333
        %v416 = vunpack.c.l.b16 %v334
        %v417 = vunpack.c.h.b16 %v334
        %v418 = vunpack.c.l.b16 %v335
        %v419 = vunpack.c.h.b16 %v335
        %v420 = vunpack.c.l.b16 %v336
        %v421 = vunpack.c.h.b16 %v336
        %v422 = vunpack.c.l.b16 %v337
        %v423 = vunpack.c.h.b16 %v337
        %v424 = vunpack.c.l.b16 %v338
        %v425 = vunpack.c.h.b16 %v338
        %v426 = vunpack.c.l.b16 %v339
        %v427 = vunpack.c.h.b16 %v339
        %v428 = vunpack.c.l.b16 %v340
        %v429 = vunpack.c.h.b16 %v340
        %v430 = vunpack.c.l.b16 %v341
        %v431 = vunpack.c.h.b16 %v341
        %v432 = vunpack.c.l.b16 %v342
        %v433 = vunpack.c.h.b16 %v342
        %v434 = vunpack.c.l.b16 %v343
        %v435 = vunpack.c.h.b16 %v343
        %v436 = vunpack.c.l.b16 %v344
        %v437 = vunpack.c.h.b16 %v344
        %v438 = vunpack.c.l.b16 %v345
        %v439 = vunpack.c.h.b16 %v345
        %v440 = vpack.c.b16 %v410, %v408
        %v441 = vpack.c.b16 %v411, %v409
        %v442 = vpack.c.b16 %v414, %v412
        %v443 = vpack.c.b16 %v415, %v413
        %v444 = vpack.c.b16 %v418, %v416
        %v445 = vpack.c.b16 %v419, %v417
        %v446 = vpack.c.b16 %v422, %v420
        %v447 = vpack.c.b16 %v423, %v421
        %v448 = vpack.c.b16 %v426, %v424
        %v449 = vpack.c.b16 %v427, %v425
        %v450 = vpack.c.b16 %v430, %v428
        %v451 = vpack.c.b16 %v431, %v429
        %v452 = vpack.c.b16 %v434, %v432
        %v453 = vpack.c.b16 %v435, %v433
        %v454 = vpack.c.b16 %v438, %v436
        %v455 = vpack.c.b16 %v439, %v437
        %v504 = vunpack.c.l.b16 %v346
        %v505 = vunpack.c.h.b16 %v346
        %v506 = vunpack.c.l.b16 %v347
        %v507 = vunpack.c.h.b16 %v347
        %v508 = vunpack.c.l.b16 %v348
        %v509 = vunpack.c.h.b16 %v348
        %v510 = vunpack.c.l.b16 %v349
        %v511 = vunpack.c.h.b16 %v349
        %v512 = vunpack.c.l.b16 %v350
        %v513 = vunpack.c.h.b16 %v350
        %v514 = vunpack.c.l.b16 %v351
        %v515 = vunpack.c.h.b16 %v351
        %v516 = vunpack.c.l.b16 %v352
        %v517 = vunpack.c.h.b16 %v352
        %v518 = vunpack.c.l.b16 %v353
        %v519 = vunpack.c.h.b16 %v353
        %v520 = vunpack.c.l.b16 %v354
        %v521 = vunpack.c.h.b16 %v354
        %v522 = vunpack.c.l.b16 %v355
        %v523 = vunpack.c.h.b16 %v355
        %v524 = vunpack.c.l.b16 %v356
        %v525 = vunpack.c.h.b16 %v356
        %v526 = vunpack.c.l.b16 %v357
        %v527 = vunpack.c.h.b16 %v357
        %v528 = vunpack.c.l.b16 %v358
        %v529 = vunpack.c.h.b16 %v358
        %v530 = vunpack.c.l.b16 %v359
        %v531 = vunpack.c.h.b16 %v359
        %v532 = vunpack.c.l.b16 %v360
        %v533 = vunpack.c.h.b16 %v360
        %v534 = vunpack.c.l.b16 %v361
        %v535 = vunpack.c.h.b16 %v361
        %v536 = vunpack.c.l.b16 %v362
        %v537 = vunpack.c.h.b16 %v362
        %v538 = vunpack.c.l.b16 %v363
        %v539 = vunpack.c.h.b16 %v363
        %v540 = vunpack.c.l.b16 %v364
        %v541 = vunpack.c.h.b16 %v364
        %v542 = vunpack.c.l.b16 %v365
        %v543 = vunpack.c.h.b16 %v365
        %v544 = vunpack.c.l.b16 %v366
        %v545 = vunpack.c.h.b16 %v366
        %v546 = vunpack.c.l.b16 %v367
        %v547 = vunpack.c.h.b16 %v367
        %v548 = vunpack.c.l.b16 %v368
        %v549 = vunpack.c.h.b16 %v368
        %v550 = vunpack.c.l.b16 %v369
        %v551 = vunpack.c.h.b16 %v369
        %v552 = vunpack.c.l.b16 %v370
        %v553 = vunpack.c.h.b16 %v370
        %v554 = vunpack.c.l.b16 %v371
        %v555 = vunpack.c.h.b16 %v371
        %v556 = vunpack.c.l.b16 %v372
        %v557 = vunpack.c.h.b16 %v372
        %v558 = vunpack.c.l.b16 %v373
        %v559 = vunpack.c.h.b16 %v373
        %v560 = vunpack.c.l.b16 %v374
        %v561 = vunpack.c.h.b16 %v374
        %v562 = vunpack.c.l.b16 %v375
        %v563 = vunpack.c.h.b16 %v375
        %v564 = vunpack.c.l.b16 %v376
        %v565 = vunpack.c.h.b16 %v376
        %v566 = vunpack.c.l.b16 %v377
        %v567 = vunpack.c.h.b16 %v377
        %v568 = vpack.c.b16 %v506, %v504
        %v569 = vpack.c.b16 %v507, %v505
        %v570 = vpack.c.b16 %v510, %v508
        %v571 = vpack.c.b16 %v511, %v509
        %v572 = vpack.c.b16 %v514, %v512
        %v573 = vpack.c.b16 %v515, %v513
        %v574 = vpack.c.b16 %v518, %v516
        %v575 = vpack.c.b16 %v519, %v517
        %v576 = vpack.c.b16 %v522, %v520
        %v577 = vpack.c.b16 %v523, %v521
        %v578 = vpack.c.b16 %v526, %v524
        %v579 = vpack.c.b16 %v527, %v525
        %v580 = vpack.c.b16 %v530, %v528
        %v581 = vpack.c.b16 %v531, %v529
        %v582 = vpack.c.b16 %v534, %v532
        %v583 = vpack.c.b16 %v535, %v533
        %v584 = vpack.c.b16 %v538, %v536
        %v585 = vpack.c.b16 %v539, %v537
        %v586 = vpack.c.b16 %v542, %v540
        %v587 = vpack.c.b16 %v543, %v541
        %v588 = vpack.c.b16 %v546, %v544
        %v589 = vpack.c.b16 %v547, %v545
        %v590 = vpack.c.b16 %v550, %v548
        %v591 = vpack.c.b16 %v551, %v549
        %v592 = vpack.c.b16 %v554, %v552
        %v593 = vpack.c.b16 %v555, %v553
        %v594 = vpack.c.b16 %v558, %v556
        %v595 = vpack.c.b16 %v559, %v557
        %v596 = vpack.c.b16 %v562, %v560
        %v597 = vpack.c.b16 %v563, %v561
        %v598 = vpack.c.b16 %v566, %v564
        %v599 = vpack.c.b16 %v567, %v565
        %632 = vmatpush.bf16.msra.mxu0 %v582
        %633 = vmatpush.bf16.msra.mxu0 %v580
        %634 = vmatpush.bf16.msra.mxu0 %v578
        %635 = vmatpush.bf16.msra.mxu0 %v576
        %636 = vmatpush.bf16.msra.mxu0 %v574
        %637 = vmatpush.bf16.msra.mxu0 %v572
        %638 = vmatpush.bf16.msra.mxu0 %v570
        %639 = vmatpush.bf16.msra.mxu0 %v568
        %640 = vmatmul.bf16.gmra.mxu0 %v440
        %v641 = vpop.f32.mrf.mxu0
        %v642 = vadd.f32 %v388, %v641
        %v643 = vpop.f32.mrf.mxu0
        %v644 = vadd.f32 %v388, %v643
        %645 = vmatmul.bf16.gmra.mxu0 %v442
        %v646 = vpop.f32.mrf.mxu0
        %v647 = vadd.f32 %v388, %v646
        %v648 = vpop.f32.mrf.mxu0
        %v649 = vadd.f32 %v388, %v648
        %650 = vmatmul.bf16.gmra.mxu0 %v444
        %v651 = vpop.f32.mrf.mxu0
        %v652 = vadd.f32 %v388, %v651
        %v653 = vpop.f32.mrf.mxu0
        %v654 = vadd.f32 %v388, %v653
        %655 = vmatmul.bf16.gmra.mxu0 %v446
        %v656 = vpop.f32.mrf.mxu0
        %v657 = vadd.f32 %v388, %v656
        %v658 = vpop.f32.mrf.mxu0
        %v659 = vadd.f32 %v388, %v658
        %660 = vmatmul.bf16.gmra.mxu0 %v448
        %v661 = vpop.f32.mrf.mxu0
        %v662 = vadd.f32 %v388, %v661
        %v663 = vpop.f32.mrf.mxu0
        %v664 = vadd.f32 %v388, %v663
        %665 = vmatmul.bf16.gmra.mxu0 %v450
        %v666 = vpop.f32.mrf.mxu0
        %v667 = vadd.f32 %v388, %v666
        %v668 = vpop.f32.mrf.mxu0
        %v669 = vadd.f32 %v388, %v668
        %670 = vmatmul.bf16.gmra.mxu0 %v452
        %v671 = vpop.f32.mrf.mxu0
        %v672 = vadd.f32 %v388, %v671
        %v673 = vpop.f32.mrf.mxu0
        %v674 = vadd.f32 %v388, %v673
        %675 = vmatmul.bf16.gmra.mxu0 %v454
        %v676 = vpop.f32.mrf.mxu0
        %v677 = vadd.f32 %v388, %v676
        %v678 = vpop.f32.mrf.mxu0
        %v679 = vadd.f32 %v388, %v678
        %680 = vdwg.mxu0
        %681 = vmatpush.bf16.msra.mxu0 %v598
        %682 = vmatpush.bf16.msra.mxu0 %v596
        %683 = vmatpush.bf16.msra.mxu0 %v594
        %684 = vmatpush.bf16.msra.mxu0 %v592
        %685 = vmatpush.bf16.msra.mxu0 %v590
        %686 = vmatpush.bf16.msra.mxu0 %v588
        %687 = vmatpush.bf16.msra.mxu0 %v586
        %688 = vmatpush.bf16.msra.mxu0 %v584
        %689 = vmatmul.bf16.gmra.mxu0 %v441
        %v690 = vpop.f32.mrf.mxu0
        %v691 = vadd.f32 %v642, %v690
        %v692 = vpop.f32.mrf.mxu0
        %v693 = vadd.f32 %v644, %v692
        %694 = vmatmul.bf16.gmra.mxu0 %v443
        %v695 = vpop.f32.mrf.mxu0
        %v696 = vadd.f32 %v647, %v695
        %v697 = vpop.f32.mrf.mxu0
        %v698 = vadd.f32 %v649, %v697
        %699 = vmatmul.bf16.gmra.mxu0 %v445
        %v700 = vpop.f32.mrf.mxu0
        %v701 = vadd.f32 %v652, %v700
        %v702 = vpop.f32.mrf.mxu0
        %v703 = vadd.f32 %v654, %v702
        %704 = vmatmul.bf16.gmra.mxu0 %v447
        %v705 = vpop.f32.mrf.mxu0
        %v706 = vadd.f32 %v657, %v705
        %v707 = vpop.f32.mrf.mxu0
        %v708 = vadd.f32 %v659, %v707
        %709 = vmatmul.bf16.gmra.mxu0 %v449
        %v710 = vpop.f32.mrf.mxu0
        %v711 = vadd.f32 %v662, %v710
        %v712 = vpop.f32.mrf.mxu0
        %v713 = vadd.f32 %v664, %v712
        %714 = vmatmul.bf16.gmra.mxu0 %v451
        %v715 = vpop.f32.mrf.mxu0
        %v716 = vadd.f32 %v667, %v715
        %v717 = vpop.f32.mrf.mxu0
        %v718 = vadd.f32 %v669, %v717
        %719 = vmatmul.bf16.gmra.mxu0 %v453
        %v720 = vpop.f32.mrf.mxu0
        %v721 = vadd.f32 %v672, %v720
        %v722 = vpop.f32.mrf.mxu0
        %v723 = vadd.f32 %v674, %v722
        %724 = vmatmul.bf16.gmra.mxu0 %v455
        %v725 = vpop.f32.mrf.mxu0
        %v726 = vadd.f32 %v677, %v725
        %v727 = vpop.f32.mrf.mxu0
        %v728 = vadd.f32 %v679, %v727
        %729 = vdwg.mxu0
        %730 = vmatpush.bf16.msra.mxu0 %v583
        %731 = vmatpush.bf16.msra.mxu0 %v581
        %732 = vmatpush.bf16.msra.mxu0 %v579
        %733 = vmatpush.bf16.msra.mxu0 %v577
        %734 = vmatpush.bf16.msra.mxu0 %v575
        %735 = vmatpush.bf16.msra.mxu0 %v573
        %736 = vmatpush.bf16.msra.mxu0 %v571
        %737 = vmatpush.bf16.msra.mxu0 %v569
        %738 = vmatmul.bf16.gmra.mxu0 %v440
        %v739 = vpop.f32.mrf.mxu0
        %v740 = vadd.f32 %v389, %v739
        %v741 = vpop.f32.mrf.mxu0
        %v742 = vadd.f32 %v389, %v741
        %743 = vmatmul.bf16.gmra.mxu0 %v442
        %v744 = vpop.f32.mrf.mxu0
        %v745 = vadd.f32 %v389, %v744
        %v746 = vpop.f32.mrf.mxu0
        %v747 = vadd.f32 %v389, %v746
        %748 = vmatmul.bf16.gmra.mxu0 %v444
        %v749 = vpop.f32.mrf.mxu0
        %v750 = vadd.f32 %v389, %v749
        %v751 = vpop.f32.mrf.mxu0
        %v752 = vadd.f32 %v389, %v751
        %753 = vmatmul.bf16.gmra.mxu0 %v446
        %v754 = vpop.f32.mrf.mxu0
        %v755 = vadd.f32 %v389, %v754
        %v756 = vpop.f32.mrf.mxu0
        %v757 = vadd.f32 %v389, %v756
        %758 = vmatmul.bf16.gmra.mxu0 %v448
        %v759 = vpop.f32.mrf.mxu0
        %v760 = vadd.f32 %v389, %v759
        %v761 = vpop.f32.mrf.mxu0
        %v762 = vadd.f32 %v389, %v761
        %763 = vmatmul.bf16.gmra.mxu0 %v450
        %v764 = vpop.f32.mrf.mxu0
        %v765 = vadd.f32 %v389, %v764
        %v766 = vpop.f32.mrf.mxu0
        %v767 = vadd.f32 %v389, %v766
        %768 = vmatmul.bf16.gmra.mxu0 %v452
        %v769 = vpop.f32.mrf.mxu0
        %v770 = vadd.f32 %v389, %v769
        %v771 = vpop.f32.mrf.mxu0
        %v772 = vadd.f32 %v389, %v771
        %773 = vmatmul.bf16.gmra.mxu0 %v454
        %v774 = vpop.f32.mrf.mxu0
        %v775 = vadd.f32 %v389, %v774
        %v776 = vpop.f32.mrf.mxu0
        %v777 = vadd.f32 %v389, %v776
        %778 = vdwg.mxu0
        %779 = vmatpush.bf16.msra.mxu0 %v599
        %780 = vmatpush.bf16.msra.mxu0 %v597
        %781 = vmatpush.bf16.msra.mxu0 %v595
        %782 = vmatpush.bf16.msra.mxu0 %v593
        %783 = vmatpush.bf16.msra.mxu0 %v591
        %784 = vmatpush.bf16.msra.mxu0 %v589
        %785 = vmatpush.bf16.msra.mxu0 %v587
        %786 = vmatpush.bf16.msra.mxu0 %v585
        %787 = vmatmul.bf16.gmra.mxu0 %v441
        %v788 = vpop.f32.mrf.mxu0
        %v789 = vadd.f32 %v740, %v788
        %v790 = vpop.f32.mrf.mxu0
        %v791 = vadd.f32 %v742, %v790
        %792 = vmatmul.bf16.gmra.mxu0 %v443
        %v793 = vpop.f32.mrf.mxu0
        %v794 = vadd.f32 %v745, %v793
        %v795 = vpop.f32.mrf.mxu0
        %v796 = vadd.f32 %v747, %v795
        %797 = vmatmul.bf16.gmra.mxu0 %v445
        %v798 = vpop.f32.mrf.mxu0
        %v799 = vadd.f32 %v750, %v798
        %v800 = vpop.f32.mrf.mxu0
        %v801 = vadd.f32 %v752, %v800
        %802 = vmatmul.bf16.gmra.mxu0 %v447
        %v803 = vpop.f32.mrf.mxu0
        %v804 = vadd.f32 %v755, %v803
        %v805 = vpop.f32.mrf.mxu0
        %v806 = vadd.f32 %v757, %v805
        %807 = vmatmul.bf16.gmra.mxu0 %v449
        %v808 = vpop.f32.mrf.mxu0
        %v809 = vadd.f32 %v760, %v808
        %v810 = vpop.f32.mrf.mxu0
        %v811 = vadd.f32 %v762, %v810
        %812 = vmatmul.bf16.gmra.mxu0 %v451
        %v813 = vpop.f32.mrf.mxu0
        %v814 = vadd.f32 %v765, %v813
        %v815 = vpop.f32.mrf.mxu0
        %v816 = vadd.f32 %v767, %v815
        %817 = vmatmul.bf16.gmra.mxu0 %v453
        %v818 = vpop.f32.mrf.mxu0
        %v819 = vadd.f32 %v770, %v818
        %v820 = vpop.f32.mrf.mxu0
        %v821 = vadd.f32 %v772, %v820
        %822 = vmatmul.bf16.gmra.mxu0 %v455
        %v823 = vpop.f32.mrf.mxu0
        %v824 = vadd.f32 %v775, %v823
        %v825 = vpop.f32.mrf.mxu0
        %v826 = vadd.f32 %v777, %v825
        %827 = vdwg.mxu0
        %p828 = scmp.lt.s32.totalorder %s28, 5
        // Predicated region
        $region49: #{mlp_pallas.1} parent=31 // pred_check
          %p829 = pneg %p828
        $region50: #{mlp_pallas.1} parent=31 // pred_check_branch
          %831 = sbr.rel (%p829) target = $region52
        $region51: #{mlp_pallas.1} parent=31 // pred_region
          %v832 = vmax.f32 %v691, 0.0
          %v833 = vmax.f32 %v789, 0.0
          %v834 = vmax.f32 %v693, 0.0
          %v835 = vmax.f32 %v791, 0.0
          %v836 = vmax.f32 %v696, 0.0
          %v837 = vmax.f32 %v794, 0.0
          %v838 = vmax.f32 %v698, 0.0
          %v839 = vmax.f32 %v796, 0.0
          %v840 = vmax.f32 %v701, 0.0
          %v841 = vmax.f32 %v799, 0.0
          %v842 = vmax.f32 %v703, 0.0
          %v843 = vmax.f32 %v801, 0.0
          %v844 = vmax.f32 %v706, 0.0
          %v845 = vmax.f32 %v804, 0.0
          %v846 = vmax.f32 %v708, 0.0
          %v847 = vmax.f32 %v806, 0.0
          %v848 = vmax.f32 %v711, 0.0
          %v849 = vmax.f32 %v809, 0.0
          %v850 = vmax.f32 %v713, 0.0
          %v851 = vmax.f32 %v811, 0.0
          %v852 = vmax.f32 %v716, 0.0
          %v853 = vmax.f32 %v814, 0.0
          %v854 = vmax.f32 %v718, 0.0
          %v855 = vmax.f32 %v816, 0.0
          %v856 = vmax.f32 %v721, 0.0
          %v857 = vmax.f32 %v819, 0.0
          %v858 = vmax.f32 %v723, 0.0
          %v859 = vmax.f32 %v821, 0.0
          %v860 = vmax.f32 %v726, 0.0
          %v861 = vmax.f32 %v824, 0.0
          %v862 = vmax.f32 %v728, 0.0
          %v863 = vmax.f32 %v826, 0.0
          %v864 = vpack.c.bf16 %v833, %v832
          %v865 = vpack.c.bf16 %v835, %v834
          %v866 = vpack.c.bf16 %v837, %v836
          %v867 = vpack.c.bf16 %v839, %v838
          %v868 = vpack.c.bf16 %v841, %v840
          %v869 = vpack.c.bf16 %v843, %v842
          %v870 = vpack.c.bf16 %v845, %v844
          %v871 = vpack.c.bf16 %v847, %v846
          %v872 = vpack.c.bf16 %v849, %v848
          %v873 = vpack.c.bf16 %v851, %v850
          %v874 = vpack.c.bf16 %v853, %v852
          %v875 = vpack.c.bf16 %v855, %v854
          %v876 = vpack.c.bf16 %v857, %v856
          %v877 = vpack.c.bf16 %v859, %v858
          %v878 = vpack.c.bf16 %v861, %v860
          %v879 = vpack.c.bf16 %v863, %v862
          %880 = vst [vmem:[#allocation2] sm:$0xff] %v864
          %881 = vst [vmem:[#allocation2 + $0x8] sm:$0xff] %v865
          %882 = vst [vmem:[#allocation2 + $0x10] sm:$0xff] %v866
          %883 = vst [vmem:[#allocation2 + $0x18] sm:$0xff] %v867
          %884 = vst [vmem:[#allocation2 + $0x20] sm:$0xff] %v868
          %885 = vst [vmem:[#allocation2 + $0x28] sm:$0xff] %v869
          %886 = vst [vmem:[#allocation2 + $0x30] sm:$0xff] %v870
          %887 = vst [vmem:[#allocation2 + $0x38] sm:$0xff] %v871
          %888 = vst [vmem:[#allocation2 + $0x40] sm:$0xff] %v872
          %889 = vst [vmem:[#allocation2 + $0x48] sm:$0xff] %v873
          %890 = vst [vmem:[#allocation2 + $0x50] sm:$0xff] %v874
          %891 = vst [vmem:[#allocation2 + $0x58] sm:$0xff] %v875
          %892 = vst [vmem:[#allocation2 + $0x60] sm:$0xff] %v876
          %893 = vst [vmem:[#allocation2 + $0x68] sm:$0xff] %v877
          %894 = vst [vmem:[#allocation2 + $0x70] sm:$0xff] %v878
          %895 = vst [vmem:[#allocation2 + $0x78] sm:$0xff] %v879
        $region52: #{mlp_pallas.1} parent=31 // pred_fallthru
          _
        %p896 = scmp.eq.s32.totalorder %s28, 5
        // Predicated region
        $region53: #{mlp_pallas.1} parent=31 // pred_check
          %p897 = pneg %p896
        $region54: #{mlp_pallas.1} parent=31 // pred_check_branch
          %899 = sbr.rel (%p897) target = $region56
        $region55: #{mlp_pallas.1} parent=31 // pred_region
          %900 = vst [vmem:[%s259] sm:$0xff] %v691
          %901 = vst [vmem:[%s259 + $0x8] sm:$0xff] %v789
          %902 = vst [vmem:[%s259 + $0x10] sm:$0xff] %v693
          %903 = vst [vmem:[%s259 + $0x18] sm:$0xff] %v791
          %904 = vst [vmem:[%s259 + $0x20] sm:$0xff] %v696
          %905 = vst [vmem:[%s259 + $0x28] sm:$0xff] %v794
          %906 = vst [vmem:[%s259 + $0x30] sm:$0xff] %v698
          %907 = vst [vmem:[%s259 + $0x38] sm:$0xff] %v796
          %908 = vst [vmem:[%s259 + $0x40] sm:$0xff] %v701
          %909 = vst [vmem:[%s259 + $0x48] sm:$0xff] %v799
          %910 = vst [vmem:[%s259 + $0x50] sm:$0xff] %v703
          %911 = vst [vmem:[%s259 + $0x58] sm:$0xff] %v801
          %912 = vst [vmem:[%s259 + $0x60] sm:$0xff] %v706
          %913 = vst [vmem:[%s259 + $0x68] sm:$0xff] %v804
          %914 = vst [vmem:[%s259 + $0x70] sm:$0xff] %v708
          %915 = vst [vmem:[%s259 + $0x78] sm:$0xff] %v806
          %916 = vst [vmem:[%s259 + $0x80] sm:$0xff] %v711
          %917 = vst [vmem:[%s259 + $0x88] sm:$0xff] %v809
          %918 = vst [vmem:[%s259 + $0x90] sm:$0xff] %v713
          %919 = vst [vmem:[%s259 + $0x98] sm:$0xff] %v811
          %920 = vst [vmem:[%s259 + $0xa0] sm:$0xff] %v716
          %921 = vst [vmem:[%s259 + $0xa8] sm:$0xff] %v814
          %922 = vst [vmem:[%s259 + $0xb0] sm:$0xff] %v718
          %923 = vst [vmem:[%s259 + $0xb8] sm:$0xff] %v816
          %924 = vst [vmem:[%s259 + $0xc0] sm:$0xff] %v721
          %925 = vst [vmem:[%s259 + $0xc8] sm:$0xff] %v819
          %926 = vst [vmem:[%s259 + $0xd0] sm:$0xff] %v723
          %927 = vst [vmem:[%s259 + $0xd8] sm:$0xff] %v821
          %928 = vst [vmem:[%s259 + $0xe0] sm:$0xff] %v726
          %929 = vst [vmem:[%s259 + $0xe8] sm:$0xff] %v824
          %930 = vst [vmem:[%s259 + $0xf0] sm:$0xff] %v728
          %931 = vst [vmem:[%s259 + $0xf8] sm:$0xff] %v826
        $region56: #{mlp_pallas.1} parent=31 // pred_fallthru
          _
        %s932 = sand.u32 %s116, 1
        %s933 = scalar_lea.sflag [#allocation5], %s932
        %s934 = sand.u32 %s116, 1
        %s935 = smul.addr %s934, 256
        %s936 = scalar_lea.vmem [#allocation9], %s935
        // Predicated region
        $region57: #{mlp_pallas.1} parent=31 // pred_check
          %p937 = pneg %p126
        $region58: #{mlp_pallas.1} parent=31 // pred_check_branch
          %939 = sbr.rel (%p937) target = $region60
        $region59: #{mlp_pallas.1} parent=31 // pred_region
          %s940 = smul.u32 16, %s27
          %942 = vsyncadd %s933, 0
          %s943 = smul.addr %s940, 2
          %s944 = smul.addr %s943, 8
          %s945 = scalar_lea.hbm %s3, %s944
          %s946 = sshll.u32 %s936, 4
          %s947 = int_to_ptr.vmem [resolvable:$true] %s946
          %s948 = sshll.u32 %s945, 4
          %s949 = int_to_ptr.hbm [resolvable:$true] %s948
          %954 = dma.vmem_to_hbm [thread:$0]  %s947, 4096, %s949, %s933, 256, 256, 16
        $region60: #{mlp_pallas.1} parent=31 // pred_fallthru
          _
      $region32: #{mlp_pallas.1} parent=5 // pred_fallthru
        _
      %p955 = scmp.le.s32.totalorder 2, %s18
      // Predicated region
      $region61: #{mlp_pallas.1} parent=5 // pred_check
        %p956 = pneg %p955
      $region62: #{mlp_pallas.1} parent=5 // pred_check_branch
        %958 = sbr.rel (%p956) target = $region64
      $region63: #{mlp_pallas.1} parent=5 // pred_region
        %s959 = ssub.s32 %s18, 2
        // Predicated region
        $region65: #{mlp_pallas.1} parent=63 // pred_check
          %p960 = pneg %p132
        $region66: #{mlp_pallas.1} parent=63 // pred_check_branch
          %962 = sbr.rel (%p960) target = $region68
        $region67: #{mlp_pallas.1} parent=63 // pred_region
          %s963 = sand.u32 %s117, 1
          %s964 = scalar_lea.sflag [#allocation5], %s963
          %s965 = sand.u32 %s117, 1
          %s966 = smul.addr %s965, 256
          %s967 = scalar_lea.vmem [#allocation9], %s966
          %969 = dma.done %s964, 4096
        $region68: #{mlp_pallas.1} parent=63 // pred_fallthru
          _
      $region64: #{mlp_pallas.1} parent=5 // pred_fallthru
        _
    $region6: #{mlp_pallas.1} parent=1 // loop_footer
      %s22 = sadd.s32 1, %s18
    $region7: #{mlp_pallas.1} parent=1 // loop_footer_branch
      %17 = sbr.rel target = $region3
    $region8: #{mlp_pallas.1} parent=1 // loop_exit
      _
    %970 = vsyncpa [#allocation4], 1
    %s971 = scalar_lea.sflag [#allocation4], 1
    %972 = vsyncpa %s971, 1
    %973 = vsyncpa [#allocation7], 1
    %s974 = scalar_lea.sflag [#allocation7], 1
    %975 = vsyncpa %s974, 1
    %976 = vsyncpa [#allocation5], 1
    %s977 = scalar_lea.sflag [#allocation5], 1
    %978 = vsyncpa %s977, 1

</llo_original>
